<compile_context>
chip_gen: v5e
topology: v5e:2x2
jax: 0.10.0
libtpu: 0.0.40
codegen_flags: <defaults>
</compile_context>

<pallas_src>
import jax
import jax.numpy as jnp
from jax.experimental import pallas as pl
from jax.experimental.pallas import tpu as pltpu


def _round_up(n, m):
    return ((n + m - 1) // m) * m


def _head_kernel(x_ref, w1_ref, b1_ref, w2_ref, b2_ref, o_ref):
    # x:  [TB, H]      (streamed; cast to weight dtype only if needed)
    # w1: [H, H]   bf16   b1: [1, H]   f32
    # w2: [H, Np]  bf16   b2: [1, Np]  f32   (Np = n_out padded to 128 lanes)
    # o:  [TB, Np]        (dtype matches x)
    w1 = w1_ref[...]
    x = x_ref[...]
    if x.dtype != w1.dtype:
        x = x.astype(w1.dtype)

    # dropout (eval) -> identity
    h = jnp.dot(x, w1, preferred_element_type=jnp.float32) + b1_ref[...]

    w2 = w2_ref[...]
    # tanh in the low-precision MXU dtype (h is cast for the 2nd matmul anyway)
    h = jnp.tanh(h.astype(w2.dtype))

    # dropout (eval) -> identity
    out = jnp.dot(h, w2, preferred_element_type=jnp.float32) + b2_ref[...]

    o_ref[...] = out.astype(o_ref.dtype)


def prepare_params(w_dense, b_dense, w_out, b_out, *,
                   param_dtype=jnp.bfloat16, lane_width=128):
    """One-time parameter prep (hoisted out of the per-call hot path).

    PyTorch layout in:  w_dense [H, H] ([out, in]), b_dense [H],
                        w_out   [C, H],             b_out   [C]
    Returns kernel-layout params:
      w1 [H, H]  param_dtype (transposed),
      b1 [1, H]  f32,
      w2 [H, Np] param_dtype (transposed, zero-padded to lane_width),
      b2 [1, Np] f32 (zero-padded),
      n_out
    """
    H = w_dense.shape[1]
    n_out = w_out.shape[0]
    out_pad = _round_up(n_out, lane_width)

    w1 = jnp.asarray(w_dense, jnp.float32).T.astype(param_dtype)        # [H, H]
    b1 = jnp.asarray(b_dense, jnp.float32).reshape(1, H)                # [1, H]

    w2 = jnp.zeros((H, out_pad), param_dtype)
    w2 = w2.at[:, :n_out].set(jnp.asarray(w_out, jnp.float32).T.astype(param_dtype))
    b2 = jnp.zeros((1, out_pad), jnp.float32)
    b2 = b2.at[:, :n_out].set(jnp.asarray(b_out, jnp.float32).reshape(1, n_out))

    return w1, b1, w2, b2, n_out


def roberta_classification_head(x, params, *, block_b=2048,
                                vmem_buffer_budget=20 << 20):
    """Pallas forward pass.

    x:      [B, H]  (f32 or bf16 — streamed as given, output matches dtype)
    params: output of prepare_params (weights resident across the batch grid)
    returns [B, n_out]
    """
    w1, b1, w2, b2, n_out = params
    B, H = x.shape
    out_pad = w2.shape[1]
    out_dtype = x.dtype

    # --- batch tile selection -------------------------------------------
    # Streamed bytes per row (x in + out back), double-buffered by the pipeline.
    row_bytes = H * x.dtype.itemsize + out_pad * jnp.dtype(out_dtype).itemsize
    resident_bytes = 2 * (w1.size * w1.dtype.itemsize + w2.size * w2.dtype.itemsize
                          + b1.size * b1.dtype.itemsize + b2.size * b2.dtype.itemsize)
    tb_vmem = max(8, ((vmem_buffer_budget - resident_bytes) // (2 * row_bytes)) // 8 * 8)
    # Ensure >= 2 grid steps whenever possible so "parallel" splits the batch
    # across v7x's two TensorCores (no-op on single-TC v5e/v6e).
    tb_split = _round_up(pl.cdiv(B, 2), 8)
    tb = int(max(8, min(block_b, tb_split, tb_vmem)))

    grid = (pl.cdiv(B, tb),)   # partial boundary block handled by Pallas (no jnp.pad)

    cost = pl.CostEstimate(
        flops=2 * B * H * (H + out_pad),
        transcendentals=B * H,
        bytes_accessed=(x.size * x.dtype.itemsize
                        + w1.size * w1.dtype.itemsize
                        + w2.size * w2.dtype.itemsize
                        + b1.size * b1.dtype.itemsize
                        + b2.size * b2.dtype.itemsize
                        + B * out_pad * jnp.dtype(out_dtype).itemsize),
    )

    out = pl.pallas_call(
        _head_kernel,
        out_shape=jax.ShapeDtypeStruct((B, out_pad), out_dtype),
        grid=grid,
        in_specs=[
            pl.BlockSpec((tb, H), lambda i: (i, 0)),        # x: streamed per tile
            pl.BlockSpec((H, H), lambda i: (0, 0)),         # w1: resident
            pl.BlockSpec((1, H), lambda i: (0, 0)),         # b1: resident
            pl.BlockSpec((H, out_pad), lambda i: (0, 0)),   # w2: resident
            pl.BlockSpec((1, out_pad), lambda i: (0, 0)),   # b2: resident
        ],
        out_specs=pl.BlockSpec((tb, out_pad), lambda i: (i, 0)),
        compiler_params=pltpu.CompilerParams(
            dimension_semantics=("parallel",),
            vmem_limit_bytes=32 * 1024 * 1024,
        ),
        cost_estimate=cost,
    )(x, w1, b1, w2, b2)

    # Drop the lane padding of the 2-wide head (free slice, no batch pad now).
    return out[:, :n_out]


def _reference(x, w_dense, b_dense, w_out, b_out):
    xf = jnp.asarray(x, jnp.float32)
    h = jnp.tanh(xf @ w_dense.T + b_dense)
    return h @ w_out.T + b_out


if __name__ == "__main__":
    # Small, TPU-friendly shapes: batch=8, hidden(input_size)=32, num_labels=2.
    B, H, C = 8, 32, 2
    key = jax.random.PRNGKey(0)
    kx, kw1, kb1, kw2, kb2 = jax.random.split(key, 5)

    x = jax.random.normal(kx, (B, H), dtype=jnp.float32)

    # Deterministic parameter init mimicking nn.Linear defaults:
    # U(-1/sqrt(fan_in), 1/sqrt(fan_in)).
    bound = 1.0 / jnp.sqrt(jnp.float32(H))
    w_dense = jax.random.uniform(kw1, (H, H), jnp.float32, -bound, bound)
    b_dense = jax.random.uniform(kb1, (H,), jnp.float32, -bound, bound)
    w_out = jax.random.uniform(kw2, (C, H), jnp.float32, -bound, bound)
    b_out = jax.random.uniform(kb2, (C,), jnp.float32, -bound, bound)

    # One-time weight prep (bf16, transposed, lane-padded) outside the hot path.
    params = prepare_params(w_dense, b_dense, w_out, b_out)

    # f32 activation path.
    out = roberta_classification_head(x, params)
    jax.block_until_ready(out)
    ref = _reference(x, w_dense, b_dense, w_out, b_out)
    assert out.shape == (B, C)
    # bf16 operands with f32 accumulation: loosened tolerance vs f32 reference.
    assert jnp.allclose(out, ref, atol=5e-2, rtol=5e-2), "mismatch vs reference"

    # bf16 passthrough + ragged batch (B not a multiple of the tile; no pad copy).
    Br = 13
    xr = jax.random.normal(jax.random.PRNGKey(1), (Br, H), dtype=jnp.float32)
    xr_bf16 = xr.astype(jnp.bfloat16)
    out_r = roberta_classification_head(xr_bf16, params)
    jax.block_until_ready(out_r)
    ref_r = _reference(xr_bf16, w_dense, b_dense, w_out, b_out)
    assert out_r.shape == (Br, C)
    assert out_r.dtype == jnp.bfloat16
    assert jnp.allclose(out_r.astype(jnp.float32), ref_r, atol=1e-1, rtol=1e-1), \
        "ragged/bf16 mismatch"

    print("KERNEL_OK")
</pallas_src>

<mosaic_0001>
module attributes {stable_mosaic.version = 11 : i64} {
  func.func @_head_kernel(%arg0: i32, %arg1: memref<8x32xf32, #tpu.memory_space<vmem>>, %arg2: memref<32x32xbf16, #tpu.memory_space<vmem>>, %arg3: memref<1x32xf32, #tpu.memory_space<vmem>>, %arg4: memref<32x128xbf16, #tpu.memory_space<vmem>>, %arg5: memref<1x128xf32, #tpu.memory_space<vmem>>, %arg6: memref<8x128xf32, #tpu.memory_space<vmem>>) attributes {dimension_semantics = [#tpu.dimension_semantics<parallel>], iteration_bounds = array<i64: 1>, scalar_prefetch = 0 : i64, scratch_operands = 0 : i64, tpu.core_type = #tpu.core_type<tc>, window_params = [{transform_indices = @transform_0, window_bounds = array<i64: 8, 32>}, {pipeline_mode = #tpu.pipeline_mode<synchronous>, transform_indices = @transform_1, window_bounds = array<i64: 32, 32>}, {pipeline_mode = #tpu.pipeline_mode<synchronous>, transform_indices = @transform_2, window_bounds = array<i64: 1, 32>}, {pipeline_mode = #tpu.pipeline_mode<synchronous>, transform_indices = @transform_3, window_bounds = array<i64: 32, 128>}, {pipeline_mode = #tpu.pipeline_mode<synchronous>, transform_indices = @transform_4, window_bounds = array<i64: 1, 128>}, {transform_indices = @transform_5, window_bounds = array<i64: 8, 128>}]} {
    %c0 = arith.constant 0 : index
    %c0_0 = arith.constant 0 : index
    %0 = vector.load %arg2[%c0, %c0_0] : memref<32x32xbf16, #tpu.memory_space<vmem>>, vector<32x32xbf16>
    %c0_1 = arith.constant 0 : index
    %c0_2 = arith.constant 0 : index
    %1 = vector.load %arg1[%c0_1, %c0_2] : memref<8x32xf32, #tpu.memory_space<vmem>>, vector<8x32xf32>
    %2 = arith.truncf %1 : vector<8x32xf32> to vector<8x32xbf16>
    %cst = arith.constant dense<0.000000e+00> : vector<8x32xf32>
    %3 = tpu.matmul %2, %0, %cst {dimension_numbers = #tpu.dot_dimension_numbers<[1], [0], [0], [1], [0, 0, 1, 1], [], []>} : vector<8x32xbf16>, vector<32x32xbf16>, vector<8x32xf32> -> vector<8x32xf32>
    %c0_3 = arith.constant 0 : index
    %c0_4 = arith.constant 0 : index
    %4 = vector.load %arg3[%c0_3, %c0_4] : memref<1x32xf32, #tpu.memory_space<vmem>>, vector<1x32xf32>
    %5 = vector.broadcast %4 : vector<1x32xf32> to vector<8x32xf32>
    %6 = arith.addf %3, %5 : vector<8x32xf32>
    %c0_5 = arith.constant 0 : index
    %c0_6 = arith.constant 0 : index
    %7 = vector.load %arg4[%c0_5, %c0_6] : memref<32x128xbf16, #tpu.memory_space<vmem>>, vector<32x128xbf16>
    %8 = arith.truncf %6 : vector<8x32xf32> to vector<8x32xbf16>
    %9 = math.tanh %8 : vector<8x32xbf16>
    %cst_7 = arith.constant dense<0.000000e+00> : vector<8x128xf32>
    %10 = tpu.matmul %9, %7, %cst_7 {dimension_numbers = #tpu.dot_dimension_numbers<[1], [0], [0], [1], [0, 0, 1, 1], [], []>} : vector<8x32xbf16>, vector<32x128xbf16>, vector<8x128xf32> -> vector<8x128xf32>
    %c0_8 = arith.constant 0 : index
    %c0_9 = arith.constant 0 : index
    %11 = vector.load %arg5[%c0_8, %c0_9] : memref<1x128xf32, #tpu.memory_space<vmem>>, vector<1x128xf32>
    %12 = vector.broadcast %11 : vector<1x128xf32> to vector<8x128xf32>
    %13 = arith.addf %10, %12 : vector<8x128xf32>
    %c0_10 = arith.constant 0 : index
    %c0_11 = arith.constant 0 : index
    %14 = vector.load %arg6[%c0_10, %c0_11] : memref<8x128xf32, #tpu.memory_space<vmem>>, vector<8x128xf32>
    tpu.vector_store %arg6[%c0_10, %c0_11], %13 {strides = array<i32>} : memref<8x128xf32, #tpu.memory_space<vmem>>, vector<8x128xf32>,
    return
  }
  func.func @transform_0(%arg0: i32) -> (i32, i32) {
    %c0_i32 = arith.constant 0 : i32
    %c0_i32_0 = arith.constant 0 : i32
    return %arg0, %c0_i32 : i32, i32
  }
  func.func @transform_1(%arg0: i32) -> (i32, i32) {
    %c0_i32 = arith.constant 0 : i32
    %c0_i32_0 = arith.constant 0 : i32
    %c0_i32_1 = arith.constant 0 : i32
    return %c0_i32, %c0_i32_0 : i32, i32
  }
  func.func @transform_2(%arg0: i32) -> (i32, i32) {
    %c0_i32 = arith.constant 0 : i32
    %c0_i32_0 = arith.constant 0 : i32
    %c0_i32_1 = arith.constant 0 : i32
    return %c0_i32, %c0_i32_0 : i32, i32
  }
  func.func @transform_3(%arg0: i32) -> (i32, i32) {
    %c0_i32 = arith.constant 0 : i32
    %c0_i32_0 = arith.constant 0 : i32
    %c0_i32_1 = arith.constant 0 : i32
    return %c0_i32, %c0_i32_0 : i32, i32
  }
  func.func @transform_4(%arg0: i32) -> (i32, i32) {
    %c0_i32 = arith.constant 0 : i32
    %c0_i32_0 = arith.constant 0 : i32
    %c0_i32_1 = arith.constant 0 : i32
    return %c0_i32, %c0_i32_0 : i32, i32
  }
  func.func @transform_5(%arg0: i32) -> (i32, i32) {
    %c0_i32 = arith.constant 0 : i32
    %c0_i32_0 = arith.constant 0 : i32
    return %arg0, %c0_i32 : i32, i32
  }
}

</mosaic_0001>

<llo_original>
// kernel: tpu_custom_call.1
$region0: #{tpu_custom_call.1}
  #allocation0 [shape = 'u32[]', space=smem, size = 0x4, offset = 0x4, fixed_abs, tag = 'smem constant byte address 0x4 - core index']
  #allocation1 [shape = 'u32[72,128]{1,0:T(1,128)}', space=vmem, size = 0x9000, scoped, tag = 'internal scratch']
  %s0 = inlined_call_operand.hbm [shape: f32[8,32], index: 0, kind: input, shape index: {}]
  %s1 = inlined_call_operand.hbm [shape: bf16[32,32], index: 1, kind: input, shape index: {}]
  %s2 = inlined_call_operand.vmem [shape: f32[1,32], index: 2, kind: input, shape index: {}]
  %s3 = inlined_call_operand.hbm [shape: bf16[32,128], index: 3, kind: input, shape index: {}]
  %s4 = inlined_call_operand.vmem [shape: f32[1,128], index: 4, kind: input, shape index: {}]
  %s5 = inlined_call_operand.hbm [shape: f32[8,128], index: 5, kind: output, shape index: {}]
  %s6 = sld [smem:[#allocation0]]
  $region42: #{tpu_custom_call.1} parent=0
    _
  %s8 = ssub.s32 1, %s6
  %s9 = scalar_select 0, %s8, %s6
  $region1: #{tpu_custom_call.1} parent=0
    #allocation2 [shape = 'u8[4096]{0}', space=vmem, size = 0x1000, scoped, tag = 'input window, operand 0, single buffered']
    #allocation3 [shape = 's32[1]{0}', space=sflag, size = 0x4, scoped, tag = 'scoped memory for tpu_custom_call.1']
    #allocation4 [shape = 's32[1]{0}', space=sflag, size = 0x4, scoped, tag = 'scoped memory for tpu_custom_call.1']
    #allocation5 [shape = 'u8[8192]{0}', space=vmem, size = 0x2000, scoped, tag = 'input window, operand 1, single buffered']
    #allocation6 [shape = 's32[1]{0}', space=sflag, size = 0x4, scoped, tag = 'scoped memory for tpu_custom_call.1']
    #allocation7 [shape = 'u8[8192]{0}', space=vmem, size = 0x2000, scoped, tag = 'input window, operand 3, single buffered']
    #allocation8 [shape = 'u8[4096]{0}', space=vmem, size = 0x1000, scoped, tag = 'output window, operand 0, single buffered']
    %10 = vsyncpa [#allocation3], 0
    %11 = vsyncpa [#allocation6], 0
    %12 = vsyncpa [#allocation4], 0
    // Predicated region
    $region2: #{tpu_custom_call.1} parent=1 // pred_check
      _
    $region3: #{tpu_custom_call.1} parent=1 // pred_check_branch
      %14 = sbr.rel (0) target = $region5
    $region4: #{tpu_custom_call.1} parent=1 // pred_region
      %16 = vsyncadd [#allocation3], 0
      %s18 = sshll.u32 %s0, 4
      %s19 = int_to_ptr.hbm [resolvable:$true] %s18
      %s20 = sshll.u32 [#allocation2], 4
      %s21 = int_to_ptr.vmem [resolvable:$true] %s20
      %23 = dma.hbm_to_vmem [thread:$0]  %s19, 128, %s21, [#allocation3]
    $region5: #{tpu_custom_call.1} parent=1 // pred_fallthru
      _
    // Predicated region
    $region6: #{tpu_custom_call.1} parent=1 // pred_check
      _
    $region7: #{tpu_custom_call.1} parent=1 // pred_check_branch
      %25 = sbr.rel (0) target = $region9
    $region8: #{tpu_custom_call.1} parent=1 // pred_region
      %27 = vsyncadd [#allocation6], 0
      %s28 = sshll.u32 %s1, 4
      %s29 = int_to_ptr.hbm [resolvable:$true] %s28
      %s30 = sshll.u32 [#allocation5], 4
      %s31 = int_to_ptr.vmem [resolvable:$true] %s30
      %36 = dma.hbm_to_vmem [thread:$0]  %s29, 256, %s31, [#allocation6], 64, 64, 4
    $region9: #{tpu_custom_call.1} parent=1 // pred_fallthru
      _
    // Predicated region
    $region10: #{tpu_custom_call.1} parent=1 // pred_check
      _
    $region11: #{tpu_custom_call.1} parent=1 // pred_check_branch
      %38 = sbr.rel (0) target = $region13
    $region12: #{tpu_custom_call.1} parent=1 // pred_region
      _
    $region13: #{tpu_custom_call.1} parent=1 // pred_fallthru
      _
    // Predicated region
    $region14: #{tpu_custom_call.1} parent=1 // pred_check
      _
    $region15: #{tpu_custom_call.1} parent=1 // pred_check_branch
      %40 = sbr.rel (0) target = $region17
    $region16: #{tpu_custom_call.1} parent=1 // pred_region
      %42 = vsyncadd [#allocation6], 0
      %s43 = sshll.u32 %s3, 4
      %s44 = int_to_ptr.hbm [resolvable:$true] %s43
      %s45 = sshll.u32 [#allocation7], 4
      %s46 = int_to_ptr.vmem [resolvable:$true] %s45
      %51 = dma.hbm_to_vmem [thread:$0]  %s44, 256, %s46, [#allocation6], 64, 64, 4
    $region17: #{tpu_custom_call.1} parent=1 // pred_fallthru
      _
    // Predicated region
    $region18: #{tpu_custom_call.1} parent=1 // pred_check
      _
    $region19: #{tpu_custom_call.1} parent=1 // pred_check_branch
      %53 = sbr.rel (0) target = $region21
    $region20: #{tpu_custom_call.1} parent=1 // pred_region
      _
    $region21: #{tpu_custom_call.1} parent=1 // pred_fallthru
      _
    // Predicated region
    $region22: #{tpu_custom_call.1} parent=1 // pred_check
      _
    $region23: #{tpu_custom_call.1} parent=1 // pred_check_branch
      %55 = sbr.rel (0) target = $region25
    $region24: #{tpu_custom_call.1} parent=1 // pred_region
      %57 = dma.done [#allocation3], 128
    $region25: #{tpu_custom_call.1} parent=1 // pred_fallthru
      _
    // Predicated region
    $region26: #{tpu_custom_call.1} parent=1 // pred_check
      _
    $region27: #{tpu_custom_call.1} parent=1 // pred_check_branch
      %59 = sbr.rel (0) target = $region29
    $region28: #{tpu_custom_call.1} parent=1 // pred_region
      %61 = dma.done [#allocation6], 256
    $region29: #{tpu_custom_call.1} parent=1 // pred_fallthru
      _
    // Predicated region
    $region30: #{tpu_custom_call.1} parent=1 // pred_check
      _
    $region31: #{tpu_custom_call.1} parent=1 // pred_check_branch
      %63 = sbr.rel (0) target = $region33
    $region32: #{tpu_custom_call.1} parent=1 // pred_region
      %65 = dma.done [#allocation6], 256
    $region33: #{tpu_custom_call.1} parent=1 // pred_fallthru
      _
    %v67 = vld [vmem:[#allocation5] sm:$0xf]
    %v68 = vld [vmem:[#allocation5 + $0x4] sm:$0xf]
    %v69 = vld [vmem:[#allocation5 + $0x8] sm:$0xf]
    %v70 = vld [vmem:[#allocation5 + $0xc] sm:$0xf]
    %v71 = vld [vmem:[#allocation2] sm:$0xff]
    %v72 = vpack.c.bf16 %v71, %v71
    %v73 = vld [vmem:[%s2] sm:$0x1]
    %v75 = vperm.slane %v73, 0
    %v81 = vunpack.c.l.b16 %v67
    %v82 = vunpack.c.l.b16 %v68
    %v83 = vunpack.c.l.b16 %v69
    %v84 = vunpack.c.l.b16 %v70
    %v85 = vpack.c.b16 %v82, %v81
    %v86 = vpack.c.b16 %v84, %v83
    %vm89 = vcmask 261120
    %v91 = vsel %vm89, %v72, 0
    %93 = vmatpush.bf16.msra.mxu0 0
    %94 = vmatpush.bf16.msra.mxu0 0
    %95 = vmatpush.bf16.msra.mxu0 0
    %96 = vmatpush.bf16.msra.mxu0 0
    %97 = vmatpush.bf16.msra.mxu0 0
    %98 = vmatpush.bf16.msra.mxu0 0
    %99 = vmatpush.bf16.msra.mxu0 %v86
    %100 = vmatpush.bf16.msra.mxu0 %v85
    %101 = vmatmul.bf16.gmra.mxu0 %v91
    %v102 = vpop.f32.mrf.mxu0
    %v103 = vadd.f32 %v75, %v102
    %v104 = vpop.f32.mrf.mxu0
    %105 = vdwg.mxu0
    %v106 = vld [vmem:[#allocation7] sm:$0xf]
    %v107 = vld [vmem:[#allocation7 + $0x4] sm:$0xf]
    %v108 = vld [vmem:[#allocation7 + $0x8] sm:$0xf]
    %v109 = vld [vmem:[#allocation7 + $0xc] sm:$0xf]
    %v110 = vpack.c.bf16 %v103, %v103
    %v111 = vunpack.c.l.bf16 %v110
    %v112 = vtanh.pop %v111
    %v113 = vpack.c.bf16 %v112, %v112
    %v114 = vld [vmem:[%s4] sm:$0x1]
    %v116 = vperm.slane %v114, 0
    %v122 = vunpack.c.l.b16 %v106
    %v123 = vunpack.c.l.b16 %v107
    %v124 = vunpack.c.l.b16 %v108
    %v125 = vunpack.c.l.b16 %v109
    %v126 = vpack.c.b16 %v123, %v122
    %v127 = vpack.c.b16 %v125, %v124
    %v131 = vsel %vm89, %v113, 0
    %133 = vmatpush.bf16.msra.mxu0 0
    %134 = vmatpush.bf16.msra.mxu0 0
    %135 = vmatpush.bf16.msra.mxu0 0
    %136 = vmatpush.bf16.msra.mxu0 0
    %137 = vmatpush.bf16.msra.mxu0 0
    %138 = vmatpush.bf16.msra.mxu0 0
    %139 = vmatpush.bf16.msra.mxu0 %v127
    %140 = vmatpush.bf16.msra.mxu0 %v126
    %141 = vmatmul.bf16.gmra.mxu0 %v131
    %v142 = vpop.f32.mrf.mxu0
    %v143 = vadd.f32 %v116, %v142
    %v144 = vpop.f32.mrf.mxu0
    %145 = vdwg.mxu0
    %146 = vst [vmem:[#allocation8] sm:$0xff] %v143
    // Predicated region
    $region34: #{tpu_custom_call.1} parent=1 // pred_check
      _
    $region35: #{tpu_custom_call.1} parent=1 // pred_check_branch
      %148 = sbr.rel (0) target = $region37
    $region36: #{tpu_custom_call.1} parent=1 // pred_region
      %150 = vsyncadd [#allocation4], 0
      %s152 = sshll.u32 [#allocation8], 4
      %s153 = int_to_ptr.vmem [resolvable:$true] %s152
      %s154 = sshll.u32 %s5, 4
      %s155 = int_to_ptr.hbm [resolvable:$true] %s154
      %157 = dma.vmem_to_hbm [thread:$0]  %s153, 128, %s155, [#allocation4]
    $region37: #{tpu_custom_call.1} parent=1 // pred_fallthru
      _
    // Predicated region
    $region38: #{tpu_custom_call.1} parent=1 // pred_check
      _
    $region39: #{tpu_custom_call.1} parent=1 // pred_check_branch
      %159 = sbr.rel (0) target = $region41
    $region40: #{tpu_custom_call.1} parent=1 // pred_region
      %161 = dma.done [#allocation4], 128
    $region41: #{tpu_custom_call.1} parent=1 // pred_fallthru
      _
    %162 = vsyncpa [#allocation3], 1
    %163 = vsyncpa [#allocation6], 1
    %164 = vsyncpa [#allocation4], 1

</llo_original>
